<compile_context>
chip_gen: v6e
topology: v6e:2x2x1
jax: 0.10.0
libtpu: 0.0.40
codegen_flags: <defaults>
</compile_context>

<pallas_src>
import functools

import jax
import jax.numpy as jnp
from jax.experimental import pallas as pl
from jax.experimental.pallas import tpu as pltpu


# ---------------------------------------------------------------------------
# Shared MLP math: fused first layer, padded second-layer heads.
#   lstm : (Bl, nh)      w1c : (nh, 2nh)    b1c : (1, 2nh)
#   w2g/w2b : (2nh, C)   (zero-padded so each head only sees its own hidden)
# ---------------------------------------------------------------------------
def _gamma_beta(lstm, w1c, b1c, w2g, b2g, w2b, b2b):
    h = jnp.dot(lstm.astype(jnp.float32), w1c,
                preferred_element_type=jnp.float32) + b1c
    h = jnp.maximum(h, 0.0)
    gamma = jnp.dot(h, w2g, preferred_element_type=jnp.float32) + b2g
    beta = jnp.dot(h, w2b, preferred_element_type=jnp.float32) + b2b
    return gamma, beta


# ---------------------------------------------------------------------------
# Kernel A (small problems): fused MLP + broadcast affine, fully VMEM-resident
# ---------------------------------------------------------------------------
def _fused_affine_kernel(lstm_ref, w1c_ref, b1c_ref, w2g_ref, b2g_ref,
                         w2b_ref, b2b_ref, x_ref, out_ref, *, batch):
    gamma, beta = _gamma_beta(lstm_ref[...], w1c_ref[...], b1c_ref[...],
                              w2g_ref[...], b2g_ref[...],
                              w2b_ref[...], b2b_ref[...])          # (Bl, C)
    if gamma.shape[0] != batch:        # PyTorch broadcast for 1-D lstm_output
        gamma = jnp.broadcast_to(gamma, (batch, gamma.shape[1]))
        beta = jnp.broadcast_to(beta, (batch, beta.shape[1]))
    x = x_ref[...].astype(jnp.float32)                             # (B, C, HW)
    y = gamma[:, :, None] * x + beta[:, :, None]
    out_ref[...] = y.astype(out_ref.dtype)


# ---------------------------------------------------------------------------
# Kernel B1 (large problems): tiny gamma/beta MLPs, single invocation
# ---------------------------------------------------------------------------
def _mlp_kernel(lstm_ref, w1c_ref, b1c_ref, w2g_ref, b2g_ref,
                w2b_ref, b2b_ref, gamma_ref, beta_ref):
    gamma, beta = _gamma_beta(lstm_ref[...], w1c_ref[...], b1c_ref[...],
                              w2g_ref[...], b2g_ref[...],
                              w2b_ref[...], b2b_ref[...])
    gamma_ref[...] = gamma
    beta_ref[...] = beta


# ---------------------------------------------------------------------------
# Kernel B2 (large problems): tiled HBM-bandwidth-bound broadcast affine
# ---------------------------------------------------------------------------
def _apply_kernel(gamma_ref, beta_ref, x_ref, out_ref):
    # gamma/beta: (row_tile, 1) f32; x: (row_tile, lane_tile)
    y = gamma_ref[...] * x_ref[...] + beta_ref[...]
    out_ref[...] = y.astype(out_ref.dtype)


def _choose_tiles(rows, cols):
    """(8,128)-aligned caps; full extent only when it fits under the cap.
    Ragged last blocks (aligned block shapes) handle non-divisible dims."""
    ROW_CAP, LANE_CAP = 512, 2048            # up to 512*2048*4B = 4 MiB / block
    row_tile = rows if rows <= ROW_CAP else ROW_CAP
    lane_tile = cols if cols <= LANE_CAP else LANE_CAP
    # v7x has 2 TensorCores: make sure the parallel grid has >= 2 programs.
    if pl.cdiv(rows, row_tile) * pl.cdiv(cols, lane_tile) < 2:
        if cols > 128:
            lane_tile = max(128, ((cols // 2 + 127) // 128) * 128)
        elif rows > 8:
            row_tile = max(8, ((rows // 2 + 7) // 8) * 8)
    return row_tile, lane_tile


# ---------------------------------------------------------------------------
# Wrapper
# ---------------------------------------------------------------------------
_FUSE_X_BYTES = 1 << 20   # below this, run the single fused kernel


def _fuse_mlp_params(params):
    """Concatenate the two first layers; zero-pad the two second layers so a
    single shared hidden tensor feeds both heads with no in-kernel slicing."""
    nh = params["w1g"].shape[0]
    C = params["w2g"].shape[1]
    dt = params["w2g"].dtype
    zeros = jnp.zeros((nh, C), dt)
    w1c = jnp.concatenate([params["w1g"], params["w1b"]], axis=1)   # (nh, 2nh)
    b1c = jnp.concatenate([params["b1g"], params["b1b"]], axis=1)   # (1, 2nh)
    w2g = jnp.concatenate([params["w2g"], zeros], axis=0)           # (2nh, C)
    w2b = jnp.concatenate([zeros, params["w2b"]], axis=0)           # (2nh, C)
    return (w1c, b1c, w2g, params["b2g"], w2b, params["b2b"])


def affine_forward(x, lstm_output, params):
    """x: (B, C, H, W) NCHW.  lstm_output: (B, num_hidden), (1, num_hidden) or
    (num_hidden,) (the PyTorch dim()==1 path, broadcast over batch)."""
    if lstm_output.ndim == 1:
        lstm_output = lstm_output[None, :]

    B, C, H, W = x.shape
    Bl = lstm_output.shape[0]
    assert Bl in (1, B), "lstm_output batch must be 1 or match x batch"
    HW = H * W
    rows = B * C
    itemsize = jnp.dtype(x.dtype).itemsize

    mlp_args = _fuse_mlp_params(params)
    vmem = pl.BlockSpec(memory_space=pltpu.MemorySpace.VMEM)

    # ---------------- small problems: single fused kernel -------------------
    if rows * HW * itemsize <= _FUSE_X_BYTES:
        kern = functools.partial(_fused_affine_kernel, batch=B)
        out3 = pl.pallas_call(
            kern,
            out_shape=jax.ShapeDtypeStruct((B, C, HW), x.dtype),
            in_specs=[vmem] * 8,
            out_specs=vmem,
        )(lstm_output, *mlp_args, x.reshape(B, C, HW))
        return out3.reshape(B, C, H, W)

    # ---------------- large problems: two-stage pipeline --------------------
    # Stage 1: gamma/beta via one-shot MLP kernel.
    gamma, beta = pl.pallas_call(
        _mlp_kernel,
        out_shape=(jax.ShapeDtypeStruct((Bl, C), jnp.float32),
                   jax.ShapeDtypeStruct((Bl, C), jnp.float32)),
        in_specs=[vmem] * 7,
        out_specs=(vmem, vmem),
    )(lstm_output, *mlp_args)

    if Bl == 1 and B > 1:              # PyTorch expand_as over batch
        gamma = jnp.broadcast_to(gamma, (B, C))
        beta = jnp.broadcast_to(beta, (B, C))

    gamma2 = gamma.reshape(rows, 1)
    beta2 = beta.reshape(rows, 1)
    x2 = x.reshape(rows, HW)           # lane-dense (B*C, H*W) view

    row_tile, lane_tile = _choose_tiles(rows, HW)
    grid = (pl.cdiv(rows, row_tile), pl.cdiv(HW, lane_tile))

    cost = pl.CostEstimate(
        flops=2 * rows * HW,
        transcendentals=0,
        bytes_accessed=2 * rows * HW * itemsize + 2 * rows * 4,
    )

    out_flat = pl.pallas_call(
        _apply_kernel,
        out_shape=jax.ShapeDtypeStruct((rows, HW), x.dtype),
        grid=grid,
        in_specs=[
            # gamma/beta fetched once per row tile (index_map independent of j)
            pl.BlockSpec((row_tile, 1), lambda i, j: (i, 0)),
            pl.BlockSpec((row_tile, 1), lambda i, j: (i, 0)),
            pl.BlockSpec((row_tile, lane_tile), lambda i, j: (i, j),
                         pipeline_mode=pl.Buffered(3)),
        ],
        out_specs=pl.BlockSpec((row_tile, lane_tile), lambda i, j: (i, j)),
        compiler_params=pltpu.CompilerParams(
            dimension_semantics=("parallel", "parallel"),
            vmem_limit_bytes=32 * 1024 * 1024),
        cost_estimate=cost,
    )(gamma2, beta2, x2)

    return out_flat.reshape(B, C, H, W)


# ---------------------------------------------------------------------------
# Parameter init matching the PyTorch module (weights stored as (in, out))
# ---------------------------------------------------------------------------
def init_params(key, num_features, num_hidden, dtype=jnp.float32):
    """linear2 of both MLPs: weight = 0; gamma bias = 1, beta bias = 0.
    linear1 of both MLPs: uniform(-1/sqrt(in), 1/sqrt(in)) like torch default."""
    k1, k2, k3, k4 = jax.random.split(key, 4)
    bound = 1.0 / jnp.sqrt(jnp.asarray(num_hidden, dtype))
    u = lambda k, shape: jax.random.uniform(k, shape, dtype, -bound, bound)
    return {
        # mlp_gamma
        "w1g": u(k1, (num_hidden, num_hidden)),
        "b1g": u(k2, (1, num_hidden)),
        "w2g": jnp.zeros((num_hidden, num_features), dtype),
        "b2g": jnp.ones((1, num_features), dtype),
        # mlp_beta
        "w1b": u(k3, (num_hidden, num_hidden)),
        "b1b": u(k4, (1, num_hidden)),
        "w2b": jnp.zeros((num_hidden, num_features), dtype),
        "b2b": jnp.zeros((1, num_features), dtype),
    }


def _reference(x, lstm_output, p):
    """Pure-JAX reference for validation."""
    if lstm_output.ndim == 1:
        lstm_output = lstm_output[None, :]
    hg = jnp.maximum(lstm_output @ p["w1g"] + p["b1g"], 0.0)
    gamma = hg @ p["w2g"] + p["b2g"]
    hb = jnp.maximum(lstm_output @ p["w1b"] + p["b1b"], 0.0)
    beta = hb @ p["w2b"] + p["b2b"]
    return gamma[:, :, None, None] * x + beta[:, :, None, None]


if __name__ == "__main__":
    key = jax.random.PRNGKey(0)
    kx, kl, kp, kg, kb, kx2, kl2 = jax.random.split(key, 7)

    # ---------- Test 1: small shapes -> fused single-kernel path ------------
    B, C, H, W = 2, 4, 16, 16
    num_hidden = 32
    params = init_params(kp, num_features=C, num_hidden=num_hidden)
    # Override the zero-init second layers so the test exercises non-trivial
    # gamma/beta (the module-faithful init would make gamma==1, beta==0).
    params["w2g"] = 0.1 * jax.random.normal(kg, (num_hidden, C), jnp.float32)
    params["w2b"] = 0.1 * jax.random.normal(kb, (num_hidden, C), jnp.float32)

    x = jax.random.normal(kx, (B, C, H, W), jnp.float32)
    lstm_output = jax.random.normal(kl, (B, num_hidden), jnp.float32)

    out = jax.block_until_ready(affine_forward(x, lstm_output, params))
    ref = _reference(x, lstm_output, params)
    assert out.shape == (B, C, H, W)
    assert jnp.allclose(out, ref, atol=1e-5, rtol=1e-5)

    # 1-D lstm_output (PyTorch dim()==1 path, broadcast over batch)
    lstm_1d = jax.random.normal(kl, (num_hidden,), jnp.float32)
    out1d = jax.block_until_ready(affine_forward(x, lstm_1d, params))
    assert jnp.allclose(out1d, _reference(x, lstm_1d, params), atol=1e-5, rtol=1e-5)

    # ---------- Test 2: larger shapes -> two-stage tiled streaming path -----
    B2, C2, H2, W2 = 4, 32, 64, 64
    params2 = init_params(kp, num_features=C2, num_hidden=num_hidden)
    params2["w2g"] = 0.1 * jax.random.normal(kg, (num_hidden, C2), jnp.float32)
    params2["w2b"] = 0.1 * jax.random.normal(kb, (num_hidden, C2), jnp.float32)
    x2 = jax.random.normal(kx2, (B2, C2, H2, W2), jnp.float32)
    lstm2 = jax.random.normal(kl2, (B2, num_hidden), jnp.float32)

    out2 = jax.block_until_ready(affine_forward(x2, lstm2, params2))
    ref2 = _reference(x2, lstm2, params2)
    assert out2.shape == (B2, C2, H2, W2)
    assert jnp.allclose(out2, ref2, atol=1e-4, rtol=1e-4)

    print("KERNEL_OK")
</pallas_src>

<mosaic_0001>
module attributes {stable_mosaic.version = 11 : i64} {
  func.func @_fused_affine_kernel(%arg0: memref<2x32xf32, #tpu.memory_space<vmem>>, %arg1: memref<32x64xf32, #tpu.memory_space<vmem>>, %arg2: memref<1x64xf32, #tpu.memory_space<vmem>>, %arg3: memref<64x4xf32, #tpu.memory_space<vmem>>, %arg4: memref<1x4xf32, #tpu.memory_space<vmem>>, %arg5: memref<64x4xf32, #tpu.memory_space<vmem>>, %arg6: memref<1x4xf32, #tpu.memory_space<vmem>>, %arg7: memref<2x4x256xf32, #tpu.memory_space<vmem>>, %arg8: memref<2x4x256xf32, #tpu.memory_space<vmem>>) attributes {dimension_semantics = [], scalar_prefetch = 0 : i64, scratch_operands = 0 : i64, tpu.core_type = #tpu.core_type<tc>} {
    %c0 = arith.constant 0 : index
    %c0_0 = arith.constant 0 : index
    %0 = vector.load %arg0[%c0, %c0_0] : memref<2x32xf32, #tpu.memory_space<vmem>>, vector<2x32xf32>
    %c0_1 = arith.constant 0 : index
    %c0_2 = arith.constant 0 : index
    %1 = vector.load %arg1[%c0_1, %c0_2] : memref<32x64xf32, #tpu.memory_space<vmem>>, vector<32x64xf32>
    %c0_3 = arith.constant 0 : index
    %c0_4 = arith.constant 0 : index
    %2 = vector.load %arg2[%c0_3, %c0_4] : memref<1x64xf32, #tpu.memory_space<vmem>>, vector<1x64xf32>
    %c0_5 = arith.constant 0 : index
    %c0_6 = arith.constant 0 : index
    %3 = vector.load %arg3[%c0_5, %c0_6] : memref<64x4xf32, #tpu.memory_space<vmem>>, vector<64x4xf32>
    %c0_7 = arith.constant 0 : index
    %c0_8 = arith.constant 0 : index
    %4 = vector.load %arg4[%c0_7, %c0_8] : memref<1x4xf32, #tpu.memory_space<vmem>>, vector<1x4xf32>
    %c0_9 = arith.constant 0 : index
    %c0_10 = arith.constant 0 : index
    %5 = vector.load %arg5[%c0_9, %c0_10] : memref<64x4xf32, #tpu.memory_space<vmem>>, vector<64x4xf32>
    %c0_11 = arith.constant 0 : index
    %c0_12 = arith.constant 0 : index
    %6 = vector.load %arg6[%c0_11, %c0_12] : memref<1x4xf32, #tpu.memory_space<vmem>>, vector<1x4xf32>
    %cst = arith.constant dense<0.000000e+00> : vector<2x64xf32>
    %7 = tpu.matmul %0, %1, %cst {dimension_numbers = #tpu.dot_dimension_numbers<[1], [0], [0], [1], [0, 0, 1, 1], [], []>} : vector<2x32xf32>, vector<32x64xf32>, vector<2x64xf32> -> vector<2x64xf32>
    %8 = vector.broadcast %2 : vector<1x64xf32> to vector<2x64xf32>
    %9 = arith.addf %7, %8 : vector<2x64xf32>
    %cst_13 = arith.constant 0.000000e+00 : f32
    %10 = vector.broadcast %cst_13 : f32 to vector<2x64xf32>
    %11 = arith.maximumf %9, %10 : vector<2x64xf32>
    %cst_14 = arith.constant dense<0.000000e+00> : vector<2x4xf32>
    %12 = tpu.matmul %11, %3, %cst_14 {dimension_numbers = #tpu.dot_dimension_numbers<[1], [0], [0], [1], [0, 0, 1, 1], [], []>} : vector<2x64xf32>, vector<64x4xf32>, vector<2x4xf32> -> vector<2x4xf32>
    %13 = vector.broadcast %4 : vector<1x4xf32> to vector<2x4xf32>
    %14 = arith.addf %12, %13 : vector<2x4xf32>
    %cst_15 = arith.constant dense<0.000000e+00> : vector<2x4xf32>
    %15 = tpu.matmul %11, %5, %cst_15 {dimension_numbers = #tpu.dot_dimension_numbers<[1], [0], [0], [1], [0, 0, 1, 1], [], []>} : vector<2x64xf32>, vector<64x4xf32>, vector<2x4xf32> -> vector<2x4xf32>
    %16 = vector.broadcast %6 : vector<1x4xf32> to vector<2x4xf32>
    %17 = arith.addf %15, %16 : vector<2x4xf32>
    %c0_16 = arith.constant 0 : index
    %c0_17 = arith.constant 0 : index
    %c0_18 = arith.constant 0 : index
    %18 = vector.load %arg7[%c0_16, %c0_17, %c0_18] : memref<2x4x256xf32, #tpu.memory_space<vmem>>, vector<2x4x256xf32>
    %19 = vector.shape_cast %14 : vector<2x4xf32> to vector<2x4x1xf32>
    %20 = vector.broadcast %19 : vector<2x4x1xf32> to vector<2x4x256xf32>
    %21 = arith.mulf %20, %18 : vector<2x4x256xf32>
    %22 = vector.shape_cast %17 : vector<2x4xf32> to vector<2x4x1xf32>
    %23 = vector.broadcast %22 : vector<2x4x1xf32> to vector<2x4x256xf32>
    %24 = arith.addf %21, %23 : vector<2x4x256xf32>
    %c0_19 = arith.constant 0 : index
    %c0_20 = arith.constant 0 : index
    %c0_21 = arith.constant 0 : index
    %25 = vector.load %arg8[%c0_19, %c0_20, %c0_21] : memref<2x4x256xf32, #tpu.memory_space<vmem>>, vector<2x4x256xf32>
    tpu.vector_store %arg8[%c0_19, %c0_20, %c0_21], %24 {strides = array<i32>} : memref<2x4x256xf32, #tpu.memory_space<vmem>>, vector<2x4x256xf32>,
    return
  }
}

</mosaic_0001>

<llo_original>
// kernel: tpu_custom_call.1
$region0: #{tpu_custom_call.1}
  #allocation0 [shape = 'u32[]', space=smem, size = 0x4, offset = 0x4, fixed_abs, tag = 'smem constant byte address 0x4 - core index']
  #allocation1 [shape = 'u32[144,128]{1,0:T(1,128)}', space=vmem, size = 0x12000, scoped, tag = 'internal scratch']
  %s0 = inlined_call_operand.vmem [shape: f32[2,32], index: 0, kind: input, shape index: {}]
  %s1 = inlined_call_operand.vmem [shape: f32[32,64], index: 1, kind: input, shape index: {}]
  %s2 = inlined_call_operand.vmem [shape: f32[1,64], index: 2, kind: input, shape index: {}]
  %s3 = inlined_call_operand.vmem [shape: f32[64,4], index: 3, kind: input, shape index: {}]
  %s4 = inlined_call_operand.vmem [shape: f32[1,4], index: 4, kind: input, shape index: {}]
  %s5 = inlined_call_operand.vmem [shape: f32[64,4], index: 5, kind: input, shape index: {}]
  %s6 = inlined_call_operand.vmem [shape: f32[1,4], index: 6, kind: input, shape index: {}]
  %s7 = inlined_call_operand.vmem [shape: f32[2,4,256], index: 7, kind: input, shape index: {}]
  %s8 = inlined_call_operand.hbm [shape: f32[2,4,256], index: 8, kind: output, shape index: {}]
  %s9 = sld [smem:[#allocation0]]
  $region42: #{tpu_custom_call.1} parent=0
    _
  %s11 = ssub.s32 1, %s9
  %s12 = scalar_select 0, %s11, %s9
  $region1: #{tpu_custom_call.1} parent=0
    #allocation2 [shape = 'u8[8192]{0}', space=vmem, size = 0x2000, scoped, tag = 'output window, operand 0, single buffered']
    #allocation3 [shape = 's32[1]{0}', space=sflag, size = 0x4, scoped, tag = 'scoped memory for tpu_custom_call.1']
    %13 = vsyncpa [#allocation3], 0
    // Predicated region
    $region2: #{tpu_custom_call.1} parent=1 // pred_check
      _
    $region3: #{tpu_custom_call.1} parent=1 // pred_check_branch
      %15 = sbr.rel (0) target = $region5
    $region4: #{tpu_custom_call.1} parent=1 // pred_region
      _
    $region5: #{tpu_custom_call.1} parent=1 // pred_fallthru
      _
    // Predicated region
    $region6: #{tpu_custom_call.1} parent=1 // pred_check
      _
    $region7: #{tpu_custom_call.1} parent=1 // pred_check_branch
      %17 = sbr.rel (0) target = $region9
    $region8: #{tpu_custom_call.1} parent=1 // pred_region
      _
    $region9: #{tpu_custom_call.1} parent=1 // pred_fallthru
      _
    // Predicated region
    $region10: #{tpu_custom_call.1} parent=1 // pred_check
      _
    $region11: #{tpu_custom_call.1} parent=1 // pred_check_branch
      %19 = sbr.rel (0) target = $region13
    $region12: #{tpu_custom_call.1} parent=1 // pred_region
      _
    $region13: #{tpu_custom_call.1} parent=1 // pred_fallthru
      _
    // Predicated region
    $region14: #{tpu_custom_call.1} parent=1 // pred_check
      _
    $region15: #{tpu_custom_call.1} parent=1 // pred_check_branch
      %21 = sbr.rel (0) target = $region17
    $region16: #{tpu_custom_call.1} parent=1 // pred_region
      _
    $region17: #{tpu_custom_call.1} parent=1 // pred_fallthru
      _
    // Predicated region
    $region18: #{tpu_custom_call.1} parent=1 // pred_check
      _
    $region19: #{tpu_custom_call.1} parent=1 // pred_check_branch
      %23 = sbr.rel (0) target = $region21
    $region20: #{tpu_custom_call.1} parent=1 // pred_region
      _
    $region21: #{tpu_custom_call.1} parent=1 // pred_fallthru
      _
    // Predicated region
    $region22: #{tpu_custom_call.1} parent=1 // pred_check
      _
    $region23: #{tpu_custom_call.1} parent=1 // pred_check_branch
      %25 = sbr.rel (0) target = $region25
    $region24: #{tpu_custom_call.1} parent=1 // pred_region
      _
    $region25: #{tpu_custom_call.1} parent=1 // pred_fallthru
      _
    // Predicated region
    $region26: #{tpu_custom_call.1} parent=1 // pred_check
      _
    $region27: #{tpu_custom_call.1} parent=1 // pred_check_branch
      %27 = sbr.rel (0) target = $region29
    $region28: #{tpu_custom_call.1} parent=1 // pred_region
      _
    $region29: #{tpu_custom_call.1} parent=1 // pred_fallthru
      _
    // Predicated region
    $region30: #{tpu_custom_call.1} parent=1 // pred_check
      _
    $region31: #{tpu_custom_call.1} parent=1 // pred_check_branch
      %29 = sbr.rel (0) target = $region33
    $region32: #{tpu_custom_call.1} parent=1 // pred_region
      _
    $region33: #{tpu_custom_call.1} parent=1 // pred_fallthru
      _
    %v30 = vld [vmem:[%s0] sm:$0x3]
    %v31 = vld [vmem:[%s1] sm:$0xff]
    %v32 = vld [vmem:[%s1 + $0x8] sm:$0xff]
    %v33 = vld [vmem:[%s1 + $0x10] sm:$0xff]
    %v34 = vld [vmem:[%s1 + $0x18] sm:$0xff]
    %v35 = vld [vmem:[%s2] sm:$0x1]
    %v36 = vld [vmem:[%s3] sm:$0xff]
    %v37 = vld [vmem:[%s3 + $0x8] sm:$0xff]
    %v38 = vld [vmem:[%s3 + $0x10] sm:$0xff]
    %v39 = vld [vmem:[%s3 + $0x18] sm:$0xff]
    %v40 = vld [vmem:[%s3 + $0x20] sm:$0xff]
    %v41 = vld [vmem:[%s3 + $0x28] sm:$0xff]
    %v42 = vld [vmem:[%s3 + $0x30] sm:$0xff]
    %v43 = vld [vmem:[%s3 + $0x38] sm:$0xff]
    %v44 = vld [vmem:[%s4] sm:$0x1]
    %v45 = vld [vmem:[%s5] sm:$0xff]
    %v46 = vld [vmem:[%s5 + $0x8] sm:$0xff]
    %v47 = vld [vmem:[%s5 + $0x10] sm:$0xff]
    %v48 = vld [vmem:[%s5 + $0x18] sm:$0xff]
    %v49 = vld [vmem:[%s5 + $0x20] sm:$0xff]
    %v50 = vld [vmem:[%s5 + $0x28] sm:$0xff]
    %v51 = vld [vmem:[%s5 + $0x30] sm:$0xff]
    %v52 = vld [vmem:[%s5 + $0x38] sm:$0xff]
    %v53 = vld [vmem:[%s6] sm:$0x1]
    %v55 = vlaneseq
    %v56 = vshrl.u32 %v55, 7
    %v57 = vsub.s32 0, %v56
    %v58 = vrot.slane %v35, %v57
    %vm60 = vcmask 261120
    %v62 = vsel %vm60, %v30, 0
    %64 = vmatprep.subr.mxu0 0.0
    %65 = vmatpush1.msra.mxu0 0.0
    %66 = vmatprep.subr.mxu0 0.0
    %67 = vmatpush1.msra.mxu0 0.0
    %68 = vmatprep.subr.mxu0 0.0
    %69 = vmatpush1.msra.mxu0 0.0
    %70 = vmatprep.subr.mxu0 0.0
    %71 = vmatpush1.msra.mxu0 0.0
    %72 = vmatprep.subr.mxu0 0.0
    %73 = vmatpush1.msra.mxu0 0.0
    %74 = vmatprep.subr.mxu0 0.0
    %75 = vmatpush1.msra.mxu0 0.0
    %76 = vmatprep.subr.mxu0 0.0
    %77 = vmatpush1.msra.mxu0 0.0
    %78 = vmatprep.subr.mxu0 0.0
    %79 = vmatpush1.msra.mxu0 0.0
    %80 = vmatprep.subr.mxu0 0.0
    %81 = vmatpush1.msra.mxu0 0.0
    %82 = vmatprep.subr.mxu0 0.0
    %83 = vmatpush1.msra.mxu0 0.0
    %84 = vmatprep.subr.mxu0 0.0
    %85 = vmatpush1.msra.mxu0 0.0
    %86 = vmatprep.subr.mxu0 0.0
    %87 = vmatpush1.msra.mxu0 0.0
    %88 = vmatprep.subr.mxu0 0.0
    %89 = vmatpush1.msra.mxu0 %v34
    %90 = vmatprep.subr.mxu0 0.0
    %91 = vmatpush1.msra.mxu0 %v33
    %92 = vmatprep.subr.mxu0 0.0
    %93 = vmatpush1.msra.mxu0 %v32
    %94 = vmatprep.subr.mxu0 0.0
    %95 = vmatpush1.msra.mxu0 %v31
    %96 = vmatprep.subr.mxu0 0.0
    %97 = vmatpush2.msra.mxu0 0.0
    %98 = vmatprep.subr.mxu0 0.0
    %99 = vmatpush2.msra.mxu0 0.0
    %100 = vmatprep.subr.mxu0 0.0
    %101 = vmatpush2.msra.mxu0 0.0
    %102 = vmatprep.subr.mxu0 0.0
    %103 = vmatpush2.msra.mxu0 0.0
    %104 = vmatprep.subr.mxu0 0.0
    %105 = vmatpush2.msra.mxu0 0.0
    %106 = vmatprep.subr.mxu0 0.0
    %107 = vmatpush2.msra.mxu0 0.0
    %108 = vmatprep.subr.mxu0 0.0
    %109 = vmatpush2.msra.mxu0 0.0
    %110 = vmatprep.subr.mxu0 0.0
    %111 = vmatpush2.msra.mxu0 0.0
    %112 = vmatprep.subr.mxu0 0.0
    %113 = vmatpush2.msra.mxu0 0.0
    %114 = vmatprep.subr.mxu0 0.0
    %115 = vmatpush2.msra.mxu0 0.0
    %116 = vmatprep.subr.mxu0 0.0
    %117 = vmatpush2.msra.mxu0 0.0
    %118 = vmatprep.subr.mxu0 0.0
    %119 = vmatpush2.msra.mxu0 0.0
    %120 = vmatprep.subr.mxu0 0.0
    %121 = vmatpush2.msra.mxu0 0.0
    %122 = vmatprep.subr.mxu0 0.0
    %123 = vmatpush2.msra.mxu0 0.0
    %124 = vmatprep.subr.mxu0 0.0
    %125 = vmatpush2.msra.mxu0 0.0
    %126 = vmatprep.subr.mxu0 0.0
    %127 = vmatpush2.msra.mxu0 0.0
    %128 = vmatprep.mubr.f32.mxu0 0.0
    %129 = vmatmul.mubr.f32.gmra.mxu0 %v62
    %v130 = vpop.f32.mrf.mxu0
    %v131 = vadd.f32 %v58, %v130
    %v132 = vpop.f32.mrf.mxu0
    %133 = vdwg.mxu0
    %v134 = vmax.f32 %v131, 0.0
    %v136 = vlaneseq
    %v137 = vshrl.u32 %v136, 7
    %v138 = vsub.s32 0, %v137
    %v139 = vrot.slane %v44, %v138
    %vm141 = vcmask 523264
    %v143 = vsel %vm141, %v134, 0
    %145 = vmatprep.subr.mxu0 0.0
    %146 = vmatpush1.msra.mxu0 0.0
    %147 = vmatprep.subr.mxu0 0.0
    %148 = vmatpush1.msra.mxu0 0.0
    %149 = vmatprep.subr.mxu0 0.0
    %150 = vmatpush1.msra.mxu0 0.0
    %151 = vmatprep.subr.mxu0 0.0
    %152 = vmatpush1.msra.mxu0 0.0
    %153 = vmatprep.subr.mxu0 0.0
    %154 = vmatpush1.msra.mxu0 0.0
    %155 = vmatprep.subr.mxu0 0.0
    %156 = vmatpush1.msra.mxu0 0.0
    %157 = vmatprep.subr.mxu0 0.0
    %158 = vmatpush1.msra.mxu0 0.0
    %159 = vmatprep.subr.mxu0 0.0
    %160 = vmatpush1.msra.mxu0 0.0
    %161 = vmatprep.subr.mxu0 0.0
    %162 = vmatpush1.msra.mxu0 %v43
    %163 = vmatprep.subr.mxu0 0.0
    %164 = vmatpush1.msra.mxu0 %v42
    %165 = vmatprep.subr.mxu0 0.0
    %166 = vmatpush1.msra.mxu0 %v41
    %167 = vmatprep.subr.mxu0 0.0
    %168 = vmatpush1.msra.mxu0 %v40
    %169 = vmatprep.subr.mxu0 0.0
    %170 = vmatpush1.msra.mxu0 %v39
    %171 = vmatprep.subr.mxu0 0.0
    %172 = vmatpush1.msra.mxu0 %v38
    %173 = vmatprep.subr.mxu0 0.0
    %174 = vmatpush1.msra.mxu0 %v37
    %175 = vmatprep.subr.mxu0 0.0
    %176 = vmatpush1.msra.mxu0 %v36
    %177 = vmatprep.subr.mxu0 0.0
    %178 = vmatpush2.msra.mxu0 0.0
    %179 = vmatprep.subr.mxu0 0.0
    %180 = vmatpush2.msra.mxu0 0.0
    %181 = vmatprep.subr.mxu0 0.0
    %182 = vmatpush2.msra.mxu0 0.0
    %183 = vmatprep.subr.mxu0 0.0
    %184 = vmatpush2.msra.mxu0 0.0
    %185 = vmatprep.subr.mxu0 0.0
    %186 = vmatpush2.msra.mxu0 0.0
    %187 = vmatprep.subr.mxu0 0.0
    %188 = vmatpush2.msra.mxu0 0.0
    %189 = vmatprep.subr.mxu0 0.0
    %190 = vmatpush2.msra.mxu0 0.0
    %191 = vmatprep.subr.mxu0 0.0
    %192 = vmatpush2.msra.mxu0 0.0
    %193 = vmatprep.subr.mxu0 0.0
    %194 = vmatpush2.msra.mxu0 0.0
    %195 = vmatprep.subr.mxu0 0.0
    %196 = vmatpush2.msra.mxu0 0.0
    %197 = vmatprep.subr.mxu0 0.0
    %198 = vmatpush2.msra.mxu0 0.0
    %199 = vmatprep.subr.mxu0 0.0
    %200 = vmatpush2.msra.mxu0 0.0
    %201 = vmatprep.subr.mxu0 0.0
    %202 = vmatpush2.msra.mxu0 0.0
    %203 = vmatprep.subr.mxu0 0.0
    %204 = vmatpush2.msra.mxu0 0.0
    %205 = vmatprep.subr.mxu0 0.0
    %206 = vmatpush2.msra.mxu0 0.0
    %207 = vmatprep.subr.mxu0 0.0
    %208 = vmatpush2.msra.mxu0 0.0
    %209 = vmatprep.mubr.f32.mxu0 0.0
    %210 = vmatmul.mubr.f32.gmra.mxu0 %v143
    %v211 = vpop.f32.mrf.mxu0
    %v212 = vadd.f32 %v139, %v211
    %v213 = vpop.f32.mrf.mxu0
    %214 = vdwg.mxu0
    %v216 = vlaneseq
    %v217 = vshrl.u32 %v216, 7
    %v218 = vsub.s32 0, %v217
    %v219 = vrot.slane %v53, %v218
    %221 = vmatprep.subr.mxu0 0.0
    %222 = vmatpush1.msra.mxu0 0.0
    %223 = vmatprep.subr.mxu0 0.0
    %224 = vmatpush1.msra.mxu0 0.0
    %225 = vmatprep.subr.mxu0 0.0
    %226 = vmatpush1.msra.mxu0 0.0
    %227 = vmatprep.subr.mxu0 0.0
    %228 = vmatpush1.msra.mxu0 0.0
    %229 = vmatprep.subr.mxu0 0.0
    %230 = vmatpush1.msra.mxu0 0.0
    %231 = vmatprep.subr.mxu0 0.0
    %232 = vmatpush1.msra.mxu0 0.0
    %233 = vmatprep.subr.mxu0 0.0
    %234 = vmatpush1.msra.mxu0 0.0
    %235 = vmatprep.subr.mxu0 0.0
    %236 = vmatpush1.msra.mxu0 0.0
    %237 = vmatprep.subr.mxu0 0.0
    %238 = vmatpush1.msra.mxu0 %v52
    %239 = vmatprep.subr.mxu0 0.0
    %240 = vmatpush1.msra.mxu0 %v51
    %241 = vmatprep.subr.mxu0 0.0
    %242 = vmatpush1.msra.mxu0 %v50
    %243 = vmatprep.subr.mxu0 0.0
    %244 = vmatpush1.msra.mxu0 %v49
    %245 = vmatprep.subr.mxu0 0.0
    %246 = vmatpush1.msra.mxu0 %v48
    %247 = vmatprep.subr.mxu0 0.0
    %248 = vmatpush1.msra.mxu0 %v47
    %249 = vmatprep.subr.mxu0 0.0
    %250 = vmatpush1.msra.mxu0 %v46
    %251 = vmatprep.subr.mxu0 0.0
    %252 = vmatpush1.msra.mxu0 %v45
    %253 = vmatprep.subr.mxu0 0.0
    %254 = vmatpush2.msra.mxu0 0.0
    %255 = vmatprep.subr.mxu0 0.0
    %256 = vmatpush2.msra.mxu0 0.0
    %257 = vmatprep.subr.mxu0 0.0
    %258 = vmatpush2.msra.mxu0 0.0
    %259 = vmatprep.subr.mxu0 0.0
    %260 = vmatpush2.msra.mxu0 0.0
    %261 = vmatprep.subr.mxu0 0.0
    %262 = vmatpush2.msra.mxu0 0.0
    %263 = vmatprep.subr.mxu0 0.0
    %264 = vmatpush2.msra.mxu0 0.0
    %265 = vmatprep.subr.mxu0 0.0
    %266 = vmatpush2.msra.mxu0 0.0
    %267 = vmatprep.subr.mxu0 0.0
    %268 = vmatpush2.msra.mxu0 0.0
    %269 = vmatprep.subr.mxu0 0.0
    %270 = vmatpush2.msra.mxu0 0.0
    %271 = vmatprep.subr.mxu0 0.0
    %272 = vmatpush2.msra.mxu0 0.0
    %273 = vmatprep.subr.mxu0 0.0
    %274 = vmatpush2.msra.mxu0 0.0
    %275 = vmatprep.subr.mxu0 0.0
    %276 = vmatpush2.msra.mxu0 0.0
    %277 = vmatprep.subr.mxu0 0.0
    %278 = vmatpush2.msra.mxu0 0.0
    %279 = vmatprep.subr.mxu0 0.0
    %280 = vmatpush2.msra.mxu0 0.0
    %281 = vmatprep.subr.mxu0 0.0
    %282 = vmatpush2.msra.mxu0 0.0
    %283 = vmatprep.subr.mxu0 0.0
    %284 = vmatpush2.msra.mxu0 0.0
    %285 = vmatprep.mubr.f32.mxu0 0.0
    %286 = vmatmul.mubr.f32.gmra.mxu0 %v143
    %v287 = vpop.f32.mrf.mxu0
    %v288 = vadd.f32 %v219, %v287
    %v289 = vpop.f32.mrf.mxu0
    %290 = vdwg.mxu0
    %v291 = vld [vmem:[%s7] sm:$0xff]
    %v292 = vld [vmem:[%s7 + $0x8] sm:$0xff]
    %v293 = vlaneseq
    %v294 = vshrl.u32 %v293, 7
    %v295 = vsub.s32 0, %v294
    %v296 = vrot.slane %v212, %v295
    %298 = vbcast.lane.b32.xlu0 %v296, 256
    %v299 = vpop.permute.xlu0 %298
    %v300 = vlaneseq
    %v301 = vshrl.u32 %v300, 7
    %v302 = vsub.s32 1, %v301
    %v303 = vrot.slane %v212, %v302
    %305 = vbcast.lane.b32.xlu0 %v303, 256
    %v306 = vpop.permute.xlu0 %305
    %v309 = vcombine.high %v291, %v291
    %v310 = vcombine.high %v292, %v292
    %v313 = vmul.f32 %v299, %v291
    %v314 = vmul.f32 %v299, %v309
    %v315 = vmul.f32 %v306, %v292
    %v316 = vmul.f32 %v306, %v310
    %v317 = vlaneseq
    %v318 = vshrl.u32 %v317, 7
    %v319 = vsub.s32 0, %v318
    %v320 = vrot.slane %v288, %v319
    %322 = vbcast.lane.b32.xlu0 %v320, 256
    %v323 = vpop.permute.xlu0 %322
    %v324 = vlaneseq
    %v325 = vshrl.u32 %v324, 7
    %v326 = vsub.s32 1, %v325
    %v327 = vrot.slane %v288, %v326
    %329 = vbcast.lane.b32.xlu0 %v327, 256
    %v330 = vpop.permute.xlu0 %329
    %v331 = vadd.f32 %v313, %v323
    %v332 = vadd.f32 %v314, %v323
    %v333 = vadd.f32 %v315, %v330
    %v334 = vadd.f32 %v316, %v330
    %v339 = vcombine.low %v331, %v332
    %v340 = vcombine.low %v333, %v334
    %343 = vst [vmem:[#allocation2] sm:$0xff] %v339
    %344 = vst [vmem:[#allocation2 + $0x8] sm:$0xff] %v340
    // Predicated region
    $region34: #{tpu_custom_call.1} parent=1 // pred_check
      _
    $region35: #{tpu_custom_call.1} parent=1 // pred_check_branch
      %346 = sbr.rel (0) target = $region37
    $region36: #{tpu_custom_call.1} parent=1 // pred_region
      %s348 = ssub.s32 256, 256
      %349 = vsyncadd [#allocation3], %s348
      %s350 = sshll.u32 [#allocation2], 4
      %s351 = int_to_ptr.vmem [resolvable:$true] %s350
      %356 = dma.vmem_to_hbm [thread:$0]  %s351, 256, %s8, [#allocation3], 128, 128, 8
    $region37: #{tpu_custom_call.1} parent=1 // pred_fallthru
      _
    // Predicated region
    $region38: #{tpu_custom_call.1} parent=1 // pred_check
      _
    $region39: #{tpu_custom_call.1} parent=1 // pred_check_branch
      %358 = sbr.rel (0) target = $region41
    $region40: #{tpu_custom_call.1} parent=1 // pred_region
      %359 = dma.done [#allocation3], 256
    $region41: #{tpu_custom_call.1} parent=1 // pred_fallthru
      _
    %360 = vsyncpa [#allocation3], 1

</llo_original>
